<compile_context>
chip_gen: v7x
topology: tpu7x:2x2x1
jax: 0.10.0
libtpu: 0.0.40
codegen_flags: <defaults>
</compile_context>

<pallas_src>
import jax
import jax.numpy as jnp
from jax import lax
from jax.experimental import pallas as pl
from jax.experimental.pallas import tpu as pltpu

B = 32            # batch (must be 32 to match self.h's broadcast in PyTorch)
T = 8             # sequence length
EMB_DIM = 8
HIDDEN_DIM = 1
VOCAB = 2


def _recurrence_kernel(c_ref, x_ref, h0_ref, out_ref):
    # c_ref:   SMEM (VOCAB,) f32  -- precomputed linear_x(emb[v]) per vocab id
    # x_ref:   VMEM (T, B) int32  -- token ids, time-major (batch on lane axis)
    # h0_ref:  VMEM (1, B) f32    -- initial state, lane-major
    # out_ref: VMEM (1, B) f32    -- final state, lane-major
    c0 = c_ref[0]
    c1 = c_ref[1]
    x = x_ref[...]                                       # (T, B) int32

    # Hoisted out of the recurrence: one select + one EUP tanh over the whole
    # (T, B) slab gives u[t, b] = tanh(linear_x(embedding(x[b, t]))).
    u = jnp.tanh(jnp.where(x == 0, c0, c1))              # (T, B) f32

    # Irreducible serial recurrence; T is static so this is fully unrolled.
    h = h0_ref[...]                                      # (1, B)
    for t in range(T):
        h = u[t:t + 1, :] / jnp.tanh(h)                  # (1, B)
    out_ref[...] = h


@jax.jit
def task5_forward(x_idx, emb_table, w_x, b_x, h0):
    """x_idx: (B, T) int; emb_table: (VOCAB, D); w_x: (1, D); b_x: (1,);
    h0: (B, 1).  Returns (B, 1) f32, matching the PyTorch forward."""
    # linear_x output for each of the 2 vocab entries (exact f32 contraction).
    c = jnp.dot(emb_table.astype(jnp.float32), w_x.T.astype(jnp.float32),
                precision=lax.Precision.HIGHEST) + b_x.astype(jnp.float32)
    c = c.reshape(VOCAB)                                  # (2,) f32 -> SMEM scalars

    x_t = x_idx.T.astype(jnp.int32)                       # (T, B) time-major
    h0_row = h0.astype(jnp.float32).reshape(1, B)         # (1, B) lane-major

    out_row = pl.pallas_call(
        _recurrence_kernel,
        out_shape=jax.ShapeDtypeStruct((1, B), jnp.float32),
        in_specs=[
            pl.BlockSpec(memory_space=pltpu.MemorySpace.SMEM),   # c (2 scalars)
            pl.BlockSpec(memory_space=pltpu.MemorySpace.VMEM),   # x_t
            pl.BlockSpec(memory_space=pltpu.MemorySpace.VMEM),   # h0
        ],
        out_specs=pl.BlockSpec(memory_space=pltpu.MemorySpace.VMEM),
    )(c, x_t, h0_row)

    return out_row.reshape(B, HIDDEN_DIM)                 # back to (32, 1)


def task5_forward_ref(x_idx, emb_table, w_x, b_x, h0):
    """Pure-JAX reference mirroring the PyTorch loop exactly."""
    x_emb = emb_table[x_idx].astype(jnp.float32)          # (B, T, D)
    h = h0.astype(jnp.float32)
    for i in range(x_emb.shape[1]):
        lx = jnp.dot(x_emb[:, i, :], w_x.T,
                     precision=lax.Precision.HIGHEST) + b_x   # (B, 1)
        h = jnp.tanh(lx) / jnp.tanh(h)
    return h


if __name__ == "__main__":
    key = jax.random.PRNGKey(0)
    k_emb, k_w, k_b, k_h, k_x = jax.random.split(key, 5)

    # Deterministic "parameter" init (shapes follow the module's __init__).
    emb_table = jax.random.normal(k_emb, (VOCAB, EMB_DIM), dtype=jnp.float32)
    w_x = jax.random.uniform(k_w, (HIDDEN_DIM, EMB_DIM), dtype=jnp.float32,
                             minval=-0.35, maxval=0.35)   # Linear(8,1).weight
    b_x = jax.random.uniform(k_b, (HIDDEN_DIM,), dtype=jnp.float32,
                             minval=-0.35, maxval=0.35)   # Linear(8,1).bias
    h0 = jax.random.normal(k_h, (B, HIDDEN_DIM), dtype=jnp.float32)  # self.h

    # Input: integer token indices in {0, 1}.
    x_idx = jax.random.randint(k_x, (B, T), 0, VOCAB, dtype=jnp.int32)

    out = task5_forward(x_idx, emb_table, w_x, b_x, h0)
    out = jax.block_until_ready(out)

    ref = task5_forward_ref(x_idx, emb_table, w_x, b_x, h0)
    assert out.shape == (B, HIDDEN_DIM)
    assert jnp.allclose(out, ref, atol=1e-4, rtol=1e-4), (
        "mismatch vs reference: max abs err = "
        f"{float(jnp.max(jnp.abs(out - ref)))}")

    print("KERNEL_OK")
</pallas_src>

<mosaic_0001>
module attributes {stable_mosaic.version = 11 : i64} {
  func.func @_recurrence_kernel(%arg0: memref<2xf32, #tpu.memory_space<smem>>, %arg1: memref<8x32xi32, #tpu.memory_space<vmem>>, %arg2: memref<1x32xf32, #tpu.memory_space<vmem>>, %arg3: memref<1x32xf32, #tpu.memory_space<vmem>>) attributes {dimension_semantics = [], scalar_prefetch = 0 : i64, scratch_operands = 0 : i64, tpu.core_type = #tpu.core_type<tc>} {
    %c0 = arith.constant 0 : index
    %0 = memref.load %arg0[%c0] : memref<2xf32, #tpu.memory_space<smem>>
    %c1 = arith.constant 1 : index
    %1 = memref.load %arg0[%c1] : memref<2xf32, #tpu.memory_space<smem>>
    %c0_0 = arith.constant 0 : index
    %c0_1 = arith.constant 0 : index
    %2 = vector.load %arg1[%c0_0, %c0_1] : memref<8x32xi32, #tpu.memory_space<vmem>>, vector<8x32xi32>
    %c0_i32 = arith.constant 0 : i32
    %3 = vector.broadcast %c0_i32 : i32 to vector<8x32xi32>
    %4 = arith.cmpi eq, %2, %3 : vector<8x32xi32>
    %5 = vector.broadcast %0 : f32 to vector<8x32xf32>
    %6 = vector.broadcast %1 : f32 to vector<8x32xf32>
    %7 = arith.select %4, %5, %6 : vector<8x32xi1>, vector<8x32xf32>
    %8 = math.tanh %7 : vector<8x32xf32>
    %c0_2 = arith.constant 0 : index
    %c0_3 = arith.constant 0 : index
    %9 = vector.load %arg2[%c0_2, %c0_3] : memref<1x32xf32, #tpu.memory_space<vmem>>, vector<1x32xf32>
    %10 = vector.extract_strided_slice %8 {offsets = [0, 0], sizes = [1, 32], strides = [1, 1]} : vector<8x32xf32> to vector<1x32xf32>
    %11 = math.tanh %9 : vector<1x32xf32>
    %12 = arith.divf %10, %11 : vector<1x32xf32>
    %13 = vector.extract_strided_slice %8 {offsets = [1, 0], sizes = [1, 32], strides = [1, 1]} : vector<8x32xf32> to vector<1x32xf32>
    %14 = math.tanh %12 : vector<1x32xf32>
    %15 = arith.divf %13, %14 : vector<1x32xf32>
    %16 = vector.extract_strided_slice %8 {offsets = [2, 0], sizes = [1, 32], strides = [1, 1]} : vector<8x32xf32> to vector<1x32xf32>
    %17 = math.tanh %15 : vector<1x32xf32>
    %18 = arith.divf %16, %17 : vector<1x32xf32>
    %19 = vector.extract_strided_slice %8 {offsets = [3, 0], sizes = [1, 32], strides = [1, 1]} : vector<8x32xf32> to vector<1x32xf32>
    %20 = math.tanh %18 : vector<1x32xf32>
    %21 = arith.divf %19, %20 : vector<1x32xf32>
    %22 = vector.extract_strided_slice %8 {offsets = [4, 0], sizes = [1, 32], strides = [1, 1]} : vector<8x32xf32> to vector<1x32xf32>
    %23 = math.tanh %21 : vector<1x32xf32>
    %24 = arith.divf %22, %23 : vector<1x32xf32>
    %25 = vector.extract_strided_slice %8 {offsets = [5, 0], sizes = [1, 32], strides = [1, 1]} : vector<8x32xf32> to vector<1x32xf32>
    %26 = math.tanh %24 : vector<1x32xf32>
    %27 = arith.divf %25, %26 : vector<1x32xf32>
    %28 = vector.extract_strided_slice %8 {offsets = [6, 0], sizes = [1, 32], strides = [1, 1]} : vector<8x32xf32> to vector<1x32xf32>
    %29 = math.tanh %27 : vector<1x32xf32>
    %30 = arith.divf %28, %29 : vector<1x32xf32>
    %31 = vector.extract_strided_slice %8 {offsets = [7, 0], sizes = [1, 32], strides = [1, 1]} : vector<8x32xf32> to vector<1x32xf32>
    %32 = math.tanh %30 : vector<1x32xf32>
    %33 = arith.divf %31, %32 : vector<1x32xf32>
    %c0_4 = arith.constant 0 : index
    %c0_5 = arith.constant 0 : index
    %34 = vector.load %arg3[%c0_4, %c0_5] : memref<1x32xf32, #tpu.memory_space<vmem>>, vector<1x32xf32>
    tpu.vector_store %arg3[%c0_4, %c0_5], %33 {strides = array<i32>} : memref<1x32xf32, #tpu.memory_space<vmem>>, vector<1x32xf32>,
    return
  }
}

</mosaic_0001>

<llo_original>
// kernel: task5_forward.1
$region0: #{task5_forward.1}
  #allocation0 [shape = 'u32[]', space=smem, size = 0x4, offset = 0x4, fixed_abs, tag = 'smem constant byte address 0x4 - core index']
  #allocation1 [shape = 'u32[144,128]{1,0:T(1,128)}', space=vmem, size = 0x12000, scoped, tag = 'internal scratch']
  %s0 = inlined_call_operand.vmem [shape: f32[2], index: 0, kind: input, shape index: {}]
  %s1 = inlined_call_operand.vmem [shape: s32[8,32], index: 1, kind: input, shape index: {}]
  %s2 = inlined_call_operand.vmem [shape: f32[1,32], index: 2, kind: input, shape index: {}]
  %s3 = inlined_call_operand.hbm [shape: f32[1,32], index: 3, kind: output, shape index: {}]
  %s4 = sld [smem:[#allocation0]]
  $region26: #{task5_forward.1} parent=0
    _
  %s6 = ssub.s32 1, %s4
  %s7 = scalar_select 0, %s6, %s4
  $region1: #{task5_forward.1} parent=0
    #allocation2 [shape = 'u8[512]{0}', space=smem, size = 0x200, scoped, tag = 'input window, operand 0, single buffered']
    #allocation3 [shape = 's32[1]{0}', space=sflag, size = 0x4, scoped, tag = 'scoped memory for task5_forward.1']
    #allocation4 [shape = 's32[1]{0}', space=sflag, size = 0x4, scoped, tag = 'scoped memory for task5_forward.1']
    #allocation5 [shape = 'u8[512]{0}', space=vmem, size = 0x400, scoped, tag = 'output window, operand 0, single buffered']
    %8 = vsyncpa [#allocation4], 0
    %9 = vsyncpa [#allocation3], 0
    // Predicated region
    $region2: #{task5_forward.1} parent=1 // pred_check
      _
    $region3: #{task5_forward.1} parent=1 // pred_check_branch
      %11 = sbr.rel (0) target = $region5
    $region4: #{task5_forward.1} parent=1 // pred_region
      %s13 = ssub.s32 16, 16
      %14 = vsyncadd [#allocation4], %s13
      %s16 = sshll.u32 %s0, 4
      %s17 = int_to_ptr.vmem [resolvable:$true] %s16
      %19 = dma.vmem_to_smem %s17, 16, [#allocation2], [#allocation4]
    $region5: #{task5_forward.1} parent=1 // pred_fallthru
      _
    // Predicated region
    $region6: #{task5_forward.1} parent=1 // pred_check
      _
    $region7: #{task5_forward.1} parent=1 // pred_check_branch
      %21 = sbr.rel (0) target = $region9
    $region8: #{task5_forward.1} parent=1 // pred_region
      _
    $region9: #{task5_forward.1} parent=1 // pred_fallthru
      _
    // Predicated region
    $region10: #{task5_forward.1} parent=1 // pred_check
      _
    $region11: #{task5_forward.1} parent=1 // pred_check_branch
      %23 = sbr.rel (0) target = $region13
    $region12: #{task5_forward.1} parent=1 // pred_region
      _
    $region13: #{task5_forward.1} parent=1 // pred_fallthru
      _
    // Predicated region
    $region14: #{task5_forward.1} parent=1 // pred_check
      _
    $region15: #{task5_forward.1} parent=1 // pred_check_branch
      %25 = sbr.rel (0) target = $region17
    $region16: #{task5_forward.1} parent=1 // pred_region
      %26 = dma.done [#allocation4], 16
    $region17: #{task5_forward.1} parent=1 // pred_fallthru
      _
    %27 = sfence
    %s28 = sld [smem:[#allocation2]]
    %s29 = sld [smem:[#allocation2 + $0x1]]
    %v30 = vld [vmem:[%s1] sm:$0xff]
    %vm31 = vcmp.eq.s32.totalorder %v30, 0
    %v32 = vstv %s28
    %v33 = vstv %s29
    %v34 = vsel %vm31, %v32, %v33
    %v35 = vtanh.pop %v34
    %v36 = vld [vmem:[%s2] sm:$0x1]
    %v37 = vtanh.pop %v36
    %v38 = vrcp.pop %v37
    %v39 = vmul.f32 %v35, %v38
    %v40 = vtanh.pop %v39
    %v42 = vrot.slane %v40, 7
    %v44 = vrcp.pop %v42
    %v45 = vmul.f32 %v35, %v44
    %v46 = vtanh.pop %v45
    %v48 = vrot.slane %v46, 7
    %v50 = vrcp.pop %v48
    %v51 = vmul.f32 %v35, %v50
    %v52 = vtanh.pop %v51
    %v54 = vrot.slane %v52, 7
    %v56 = vrcp.pop %v54
    %v57 = vmul.f32 %v35, %v56
    %v58 = vtanh.pop %v57
    %v60 = vrot.slane %v58, 7
    %v62 = vrcp.pop %v60
    %v63 = vmul.f32 %v35, %v62
    %v64 = vtanh.pop %v63
    %v66 = vrot.slane %v64, 7
    %v68 = vrcp.pop %v66
    %v69 = vmul.f32 %v35, %v68
    %v70 = vtanh.pop %v69
    %v72 = vrot.slane %v70, 7
    %v74 = vrcp.pop %v72
    %v75 = vmul.f32 %v35, %v74
    %v76 = vtanh.pop %v75
    %v78 = vrot.slane %v76, 7
    %v80 = vrcp.pop %v78
    %v81 = vmul.f32 %v35, %v80
    %vm82 = vcmask 261127
    %83 = vst.msk [vmem:[#allocation5 - $0x7] sm:$0x80] %vm82, %v81
    // Predicated region
    $region18: #{task5_forward.1} parent=1 // pred_check
      _
    $region19: #{task5_forward.1} parent=1 // pred_check_branch
      %85 = sbr.rel (0) target = $region21
    $region20: #{task5_forward.1} parent=1 // pred_region
      %s87 = ssub.s32 16, 16
      %88 = vsyncadd [#allocation3], %s87
      %s90 = sshll.u32 [#allocation5], 4
      %s91 = int_to_ptr.vmem [resolvable:$true] %s90
      %93 = dma.vmem_to_hbm [thread:$0]  %s91, 16, %s3, [#allocation3]
    $region21: #{task5_forward.1} parent=1 // pred_fallthru
      _
    // Predicated region
    $region22: #{task5_forward.1} parent=1 // pred_check
      _
    $region23: #{task5_forward.1} parent=1 // pred_check_branch
      %95 = sbr.rel (0) target = $region25
    $region24: #{task5_forward.1} parent=1 // pred_region
      %96 = dma.done [#allocation3], 16
    $region25: #{task5_forward.1} parent=1 // pred_fallthru
      _
    %97 = vsyncpa [#allocation3], 1
    %98 = vsyncpa [#allocation4], 1

</llo_original>
